<compile_context>
chip_gen: v7x
topology: tpu7x:2x2x1
jax: 0.10.0
libtpu: 0.0.40
codegen_flags: <defaults>
</compile_context>

<pallas_src>
import jax
import jax.numpy as jnp
import numpy as np
from jax.experimental import pallas as pl
from jax.experimental.pallas import tpu as pltpu


def _round_up(v, m):
    return -(-v // m) * m


def weight_pool_kernel(x_ref, u_ref, o_ref):
    # x_ref: (TB, TC, W), u_ref: (TB, W), o_ref: (TB, TC)
    #
    # Numerically stable softmax over W for each batch row (f32).
    # NOTE: when B % TB != 0, the trailing rows of the last u block contain
    # out-of-bounds/garbage data; exp() there may produce inf/NaN, but rows
    # are fully independent and those rows are masked on writeback, so valid
    # outputs are unaffected.  Do NOT add any cross-row reduction here.
    u = u_ref[...].astype(jnp.float32)                        # (TB, W)
    m = jnp.max(u, axis=-1, keepdims=True)
    e = jnp.exp(u - m)
    # Exact reciprocal: the kernel is HBM-bandwidth bound, so the exact path
    # is free and avoids the ~1e-2 relative error of the approximate vrcp.
    p = e * pl.reciprocal(jnp.sum(e, axis=-1, keepdims=True), approx=False)

    # Weighted pooling on the MXU with x as the LHS operand:
    #   out[b, c] = sum_w x[b, c, w] * p[b, w]
    # "bcw,bwr->bcr" keeps K=W on x's lane dim (native LHS orientation) and the
    # (W, 1) softmax column on sublanes (native RHS), so the big (TC, W) slab
    # is consumed without an XLU transpose/relayout.  x stays in its native
    # dtype; accumulation is f32 on the MXU.
    x = x_ref[...]                                            # (TB, TC, W)
    out = jnp.einsum(
        "bcw,bwr->bcr",
        x,
        p[..., None].astype(x.dtype),
        preferred_element_type=jnp.float32,
    )[..., 0]                                                 # (TB, TC)
    o_ref[...] = out.astype(o_ref.dtype)


def weight_pool(x, u, *, tb=None, tc=None):
    """x: (B, C, H, W) with H == 1 (spatial flattened into W); u: B*W logits."""
    b, c, h, w = x.shape
    assert h == 1, "weight_pool resize semantics require h == 1 (spatial flattened into w)"
    x3 = x.reshape(b, c, w)
    u2 = u.reshape(b, w)

    itemsize = x3.dtype.itemsize
    # Sublane packing group: 8 rows for 4-byte, 16 for 2-byte, 32 for 1-byte.
    sub = 8 if itemsize >= 4 else (16 if itemsize == 2 else 32)

    # Generation-aware VMEM budget (v7x: 64 MiB/TC, v5e/v6e: 128 MiB).
    try:
        vmem_cap = int(pltpu.get_tpu_info().vmem_capacity_bytes)
    except Exception:
        vmem_cap = 64 << 20  # conservative fallback (v7x per-TC)
    per_buf_budget = int(min(16 << 20, vmem_cap // 6))  # ~10.5 MiB v7x, 16 MiB v5e/v6e

    # Padded extents (VMEM stores blocks in (sublane, lane)-tiled layout).
    w_pad = _round_up(w, 128)

    # Batch tile: at least a full sublane group so u / output blocks are not
    # 1-sublane masked accesses; grow it while a step still moves <= ~8 MiB of
    # x (amortize the ~0.35 us per-step overhead at near-roofline DMA).
    if tb is None:
        tb = min(b, sub)
        step_bytes = tb * _round_up(c, sub) * w_pad * itemsize
        while 2 * tb <= b and 2 * step_bytes <= (8 << 20):
            tb *= 2
            step_bytes *= 2

    # Channel tile: full C if the (padded) slab fits the per-buffer budget,
    # otherwise a multiple of 128 (lane-dense output block, sublane-aligned x).
    if tc is None:
        fit = per_buf_budget // max(1, tb * w_pad * itemsize)
        if fit >= c or c <= 128:
            tc = c
        else:
            tc = max(128, (fit // 128) * 128)

    # v7x has two TensorCores: make sure the "parallel" grid has >= 2 steps so
    # both cores get work when the heuristic would collapse to a single block.
    if pl.cdiv(b, tb) * pl.cdiv(c, tc) < 2 and c >= 256:
        tc = max(128, _round_up(-(-c // 2), 128))

    grid = (pl.cdiv(b, tb), pl.cdiv(c, tc))
    total_steps = grid[0] * grid[1]

    # x pipeline depth: per-step compute is near zero, so a third buffer hides
    # DMA-issue jitter at step boundaries.  Fall back to the default double
    # buffer if this JAX version does not expose pipeline_mode.
    x_index_map = lambda i, j: (i, j, 0)
    x_spec = pl.BlockSpec((tb, tc, w), x_index_map)
    x_bufs = 2
    if total_steps >= 3:
        try:
            x_spec = pl.BlockSpec((tb, tc, w), x_index_map,
                                  pipeline_mode=pl.Buffered(3))
            x_bufs = 3
        except TypeError:
            pass

    # Explicit VMEM limit from padded block sizes + headroom, capped at 75% of
    # physical VMEM for this generation (fits v7x's 64 MiB as well as v5e/v6e).
    tb_pad = _round_up(tb, sub)
    tc_sub_pad = _round_up(tc, sub)
    tc_lane_pad = _round_up(tc, 128)
    x_blk = tb * tc_sub_pad * w_pad * itemsize
    u_blk = tb_pad * w_pad * u2.dtype.itemsize
    o_blk = tb_pad * tc_lane_pad * itemsize
    vmem_need = x_bufs * x_blk + 2 * u_blk + 2 * o_blk
    vmem_limit = int(min(max(2 * vmem_need, 16 << 20), (vmem_cap * 3) // 4))

    out = pl.pallas_call(
        weight_pool_kernel,
        out_shape=jax.ShapeDtypeStruct((b, c), x.dtype),
        grid_spec=pltpu.PrefetchScalarGridSpec(
            num_scalar_prefetch=0,
            grid=grid,
            in_specs=[
                x_spec,
                # u's block index does not depend on j -> the pipeline fetches
                # it once per batch group, not once per channel tile.
                pl.BlockSpec((tb, w), lambda i, j: (i, 0)),
            ],
            out_specs=pl.BlockSpec((tb, tc), lambda i, j: (i, j)),
        ),
        compiler_params=pltpu.CompilerParams(
            dimension_semantics=("parallel", "parallel"),
            vmem_limit_bytes=vmem_limit,
        ),
    )(x3, u2)

    return out.reshape(b, c, 1, 1)


def weight_pool_ref(x, u):
    b, c, h, w = x.shape
    p = jax.nn.softmax(u.reshape(b, w).astype(jnp.float32), axis=-1)
    out = jnp.einsum("bcw,bw->bc", x.reshape(b, c, w).astype(jnp.float32), p)
    return out.reshape(b, c, 1, 1).astype(x.dtype)


def _check(x, u, rtol, atol):
    out = jax.block_until_ready(weight_pool(x, u))
    ref = weight_pool_ref(x, u)
    assert out.shape == ref.shape
    np.testing.assert_allclose(np.asarray(out), np.asarray(ref), rtol=rtol, atol=atol)


if __name__ == "__main__":
    key = jax.random.PRNGKey(0)
    kx, ku, kx2, ku2 = jax.random.split(key, 4)

    # Small shape implied by the module (h == 1: spatial flattened into w).
    B, C, H, W = 2, 4, 1, 16
    x = jax.random.normal(kx, (B, C, H, W), dtype=jnp.float32)
    u = jax.random.normal(ku, (B, 1, H, W), dtype=jnp.float32)  # b*w logits (any shape)
    # Tolerance covers possible reduced-precision MXU passes for f32 operands;
    # the softmax normalizer itself is now computed with an exact reciprocal.
    _check(x, u, rtol=5e-3, atol=5e-3)

    # Larger shape exercising the tiled path (partial batch block: 12 % 8 != 0,
    # multiple batch grid steps).
    B2, C2, W2 = 12, 256, 160
    x2 = jax.random.normal(kx2, (B2, C2, 1, W2), dtype=jnp.float32)
    u2 = jax.random.normal(ku2, (B2, W2), dtype=jnp.float32)
    _check(x2, u2, rtol=5e-3, atol=5e-3)

    print("KERNEL_OK")
</pallas_src>

<mosaic_0001>
module attributes {stable_mosaic.version = 11 : i64} {
  func.func @weight_pool_kernel(%arg0: i32, %arg1: i32, %arg2: memref<2x4x16xf32, #tpu.memory_space<vmem>>, %arg3: memref<2x16xf32, #tpu.memory_space<vmem>>, %arg4: memref<2x4xf32, #tpu.memory_space<vmem>>) attributes {dimension_semantics = [#tpu.dimension_semantics<parallel>, #tpu.dimension_semantics<parallel>], iteration_bounds = array<i64: 1, 1>, scalar_prefetch = 0 : i64, scratch_operands = 0 : i64, tpu.core_type = #tpu.core_type<tc>, window_params = [{transform_indices = @transform_0, window_bounds = array<i64: 2, 4, 16>}, {transform_indices = @transform_1, window_bounds = array<i64: 2, 16>}, {transform_indices = @transform_2, window_bounds = array<i64: 2, 4>}]} {
    %c0 = arith.constant 0 : index
    %c0_0 = arith.constant 0 : index
    %0 = vector.load %arg3[%c0, %c0_0] : memref<2x16xf32, #tpu.memory_space<vmem>>, vector<2x16xf32>
    %cst = arith.constant dense<0xFF800000> : vector<2xf32>
    %1 = vector.multi_reduction <maximumf>, %0, %cst [1] : vector<2x16xf32> to vector<2xf32>
    %2 = vector.shape_cast %1 : vector<2xf32> to vector<2x1xf32>
    %3 = vector.broadcast %2 : vector<2x1xf32> to vector<2x16xf32>
    %4 = arith.subf %0, %3 : vector<2x16xf32>
    %5 = math.exp %4 : vector<2x16xf32>
    %cst_1 = arith.constant dense<0.000000e+00> : vector<2xf32>
    %6 = vector.multi_reduction <add>, %5, %cst_1 [1] : vector<2x16xf32> to vector<2xf32>
    %7 = vector.shape_cast %6 : vector<2xf32> to vector<2x1xf32>
    %8 = tpu.reciprocal %7 : vector<2x1xf32> -> vector<2x1xf32>
    %9 = vector.broadcast %8 : vector<2x1xf32> to vector<2x16xf32>
    %10 = arith.mulf %5, %9 : vector<2x16xf32>
    %c0_2 = arith.constant 0 : index
    %c0_3 = arith.constant 0 : index
    %c0_4 = arith.constant 0 : index
    %11 = vector.load %arg2[%c0_2, %c0_3, %c0_4] : memref<2x4x16xf32, #tpu.memory_space<vmem>>, vector<2x4x16xf32>
    %12 = vector.shape_cast %10 : vector<2x16xf32> to vector<2x16x1xf32>
    "tpu.trace_start"() <{level = 10 : i32, message = "bcw,bwr->bcr"}> : () -> ()
    %cst_5 = arith.constant dense<0.000000e+00> : vector<2x4x1xf32>
    %13 = tpu.matmul %11, %12, %cst_5 {dimension_numbers = #tpu.dot_dimension_numbers<[2], [1], [1], [2], [0, 0, 0, 1, 1, 2], [0], [0]>} : vector<2x4x16xf32>, vector<2x16x1xf32>, vector<2x4x1xf32> -> vector<2x4x1xf32>
    "tpu.trace_stop"() : () -> ()
    %14 = vector.shape_cast %13 : vector<2x4x1xf32> to vector<2x4xf32>
    %c0_6 = arith.constant 0 : index
    %c0_7 = arith.constant 0 : index
    %15 = vector.load %arg4[%c0_6, %c0_7] : memref<2x4xf32, #tpu.memory_space<vmem>>, vector<2x4xf32>
    tpu.vector_store %arg4[%c0_6, %c0_7], %14 {strides = array<i32>} : memref<2x4xf32, #tpu.memory_space<vmem>>, vector<2x4xf32>,
    return
  }
  func.func @transform_0(%arg0: i32, %arg1: i32) -> (i32, i32, i32) {
    %c0_i32 = arith.constant 0 : i32
    %c0_i32_0 = arith.constant 0 : i32
    return %arg0, %arg1, %c0_i32 : i32, i32, i32
  }
  func.func @transform_1(%arg0: i32, %arg1: i32) -> (i32, i32) {
    %c0_i32 = arith.constant 0 : i32
    %c0_i32_0 = arith.constant 0 : i32
    return %arg0, %c0_i32 : i32, i32
  }
  func.func @transform_2(%arg0: i32, %arg1: i32) -> (i32, i32) {
    %c0_i32 = arith.constant 0 : i32
    return %arg0, %arg1 : i32, i32
  }
}

</mosaic_0001>

<llo_original>
// kernel: tpu_custom_call.1
$region0: #{tpu_custom_call.1}
  #allocation0 [shape = 'u32[]', space=smem, size = 0x4, offset = 0x4, fixed_abs, tag = 'smem constant byte address 0x4 - core index']
  #allocation1 [shape = 'u32[144,128]{1,0:T(1,128)}', space=vmem, size = 0x12000, scoped, tag = 'internal scratch']
  %s0 = inlined_call_operand.hbm [shape: f32[2,4,16], index: 0, kind: input, shape index: {}]
  %s1 = inlined_call_operand.vmem [shape: f32[2,16], index: 1, kind: input, shape index: {}]
  %s2 = inlined_call_operand.hbm [shape: f32[2,4], index: 2, kind: output, shape index: {}]
  %s3 = sld [smem:[#allocation0]]
  $region22: #{tpu_custom_call.1} parent=0
    _
  %s5 = ssub.s32 1, %s3
  %s6 = scalar_select 0, %s5, %s3
  $region1: #{tpu_custom_call.1} parent=0
    #allocation2 [shape = 'u8[4096]{0}', space=vmem, size = 0x1000, scoped, tag = 'input window, operand 0, single buffered']
    #allocation3 [shape = 's32[1]{0}', space=sflag, size = 0x4, scoped, tag = 'scoped memory for tpu_custom_call.1']
    #allocation4 [shape = 's32[1]{0}', space=sflag, size = 0x4, scoped, tag = 'scoped memory for tpu_custom_call.1']
    #allocation5 [shape = 'u8[1024]{0}', space=vmem, size = 0x400, scoped, tag = 'output window, operand 0, single buffered']
    %7 = vsyncpa [#allocation3], 0
    %8 = vsyncpa [#allocation4], 0
    // Predicated region
    $region2: #{tpu_custom_call.1} parent=1 // pred_check
      _
    $region3: #{tpu_custom_call.1} parent=1 // pred_check_branch
      %10 = sbr.rel (0) target = $region5
    $region4: #{tpu_custom_call.1} parent=1 // pred_region
      %s12 = ssub.s32 128, 128
      %13 = vsyncadd [#allocation3], %s12
      %s14 = sshll.u32 [#allocation2], 4
      %s15 = int_to_ptr.vmem [resolvable:$true] %s14
      %20 = dma.hbm_to_vmem [thread:$0]  %s0, 128, %s15, [#allocation3], 64, 64, 4
    $region5: #{tpu_custom_call.1} parent=1 // pred_fallthru
      _
    // Predicated region
    $region6: #{tpu_custom_call.1} parent=1 // pred_check
      _
    $region7: #{tpu_custom_call.1} parent=1 // pred_check_branch
      %22 = sbr.rel (0) target = $region9
    $region8: #{tpu_custom_call.1} parent=1 // pred_region
      _
    $region9: #{tpu_custom_call.1} parent=1 // pred_fallthru
      _
    // Predicated region
    $region10: #{tpu_custom_call.1} parent=1 // pred_check
      _
    $region11: #{tpu_custom_call.1} parent=1 // pred_check_branch
      %24 = sbr.rel (0) target = $region13
    $region12: #{tpu_custom_call.1} parent=1 // pred_region
      %25 = dma.done [#allocation3], 128
    $region13: #{tpu_custom_call.1} parent=1 // pred_fallthru
      _
    %v26 = vld [vmem:[%s1] sm:$0x3]
    %vm27 = vcmask 123904
    %v28 = vsel %vm27, %v26, -inf
    %29 = vmax.xlane.f32.xlu0 %v28
    %v30 = vpop.xlane.xlu0 %29
    %v31 = vsub.f32 %v26, %v30
    %v32 = vmul.f32 %v31, 1.442695
    %v33 = vpow.pop %v32
    %v34 = vsel %vm27, %v33, 0.0
    %35 = vadd.xlane.f32.xlu0 %v34
    %v36 = vpop.xlane.xlu0 %35
    %v37 = vrcp.pop %v36
    %v38 = vmul.f32 %v33, %v37
    %v39 = vld [vmem:[#allocation2] sm:$0xf]
    %v40 = vld [vmem:[#allocation2 + $0x4] sm:$0xf]
    %v41 = vlaneseq
    %v42 = vshrl.u32 %v41, 7
    %v43 = vsub.s32 0, %v42
    %v44 = vrot.slane %v38, %v43
    %46 = vbcast.lane.b32.xlu0 %v44, 256
    %v47 = vpop.permute.xlu0 %46
    %s49 = sor.u32 256, 8
    %50 = vbcast.lane.b32.xlu0 %v44, %s49
    %v51 = vpop.permute.xlu0 %50
    %v52 = vlaneseq
    %v53 = vshrl.u32 %v52, 7
    %v54 = vsub.s32 1, %v53
    %v55 = vrot.slane %v38, %v54
    %57 = vbcast.lane.b32.xlu0 %v55, 256
    %v58 = vpop.permute.xlu0 %57
    %s60 = sor.u32 256, 8
    %61 = vbcast.lane.b32.xlu0 %v55, %s60
    %v62 = vpop.permute.xlu0 %61
    %vm63 = vcmask 130048
    %v65 = vsel %vm63, %v39, 0
    %67 = vmatprep.subr.mxu0 0.0
    %68 = vmatpush1.msra.mxu0 %v47
    %69 = vmatprep.subr.mxu0 0.0
    %70 = vmatpush1.msra.mxu0 %v51
    %71 = vmatprep.subr.mxu0 0.0
    %72 = vmatpush1.msra.mxu0 0.0
    %73 = vmatprep.subr.mxu0 0.0
    %74 = vmatpush1.msra.mxu0 0.0
    %75 = vmatprep.subr.mxu0 0.0
    %76 = vmatpush1.msra.mxu0 0.0
    %77 = vmatprep.subr.mxu0 0.0
    %78 = vmatpush1.msra.mxu0 0.0
    %79 = vmatprep.subr.mxu0 0.0
    %80 = vmatpush1.msra.mxu0 0.0
    %81 = vmatprep.subr.mxu0 0.0
    %82 = vmatpush1.msra.mxu0 0.0
    %83 = vmatprep.subr.mxu0 0.0
    %84 = vmatpush1.msra.mxu0 0.0
    %85 = vmatprep.subr.mxu0 0.0
    %86 = vmatpush1.msra.mxu0 0.0
    %87 = vmatprep.subr.mxu0 0.0
    %88 = vmatpush1.msra.mxu0 0.0
    %89 = vmatprep.subr.mxu0 0.0
    %90 = vmatpush1.msra.mxu0 0.0
    %91 = vmatprep.subr.mxu0 0.0
    %92 = vmatpush1.msra.mxu0 0.0
    %93 = vmatprep.subr.mxu0 0.0
    %94 = vmatpush1.msra.mxu0 0.0
    %95 = vmatprep.subr.mxu0 0.0
    %96 = vmatpush1.msra.mxu0 0.0
    %97 = vmatprep.subr.mxu0 0.0
    %98 = vmatpush1.msra.mxu0 0.0
    %99 = vmatprep.subr.mxu0 0.0
    %100 = vmatpush1.msra.mxu0 0.0
    %101 = vmatprep.subr.mxu0 0.0
    %102 = vmatpush1.msra.mxu0 0.0
    %103 = vmatprep.subr.mxu0 0.0
    %104 = vmatpush1.msra.mxu0 0.0
    %105 = vmatprep.subr.mxu0 0.0
    %106 = vmatpush1.msra.mxu0 0.0
    %107 = vmatprep.subr.mxu0 0.0
    %108 = vmatpush1.msra.mxu0 0.0
    %109 = vmatprep.subr.mxu0 0.0
    %110 = vmatpush1.msra.mxu0 0.0
    %111 = vmatprep.subr.mxu0 0.0
    %112 = vmatpush1.msra.mxu0 0.0
    %113 = vmatprep.subr.mxu0 0.0
    %114 = vmatpush1.msra.mxu0 0.0
    %115 = vmatprep.subr.mxu0 0.0
    %116 = vmatpush1.msra.mxu0 0.0
    %117 = vmatprep.subr.mxu0 0.0
    %118 = vmatpush1.msra.mxu0 0.0
    %119 = vmatprep.subr.mxu0 0.0
    %120 = vmatpush1.msra.mxu0 0.0
    %121 = vmatprep.subr.mxu0 0.0
    %122 = vmatpush1.msra.mxu0 0.0
    %123 = vmatprep.subr.mxu0 0.0
    %124 = vmatpush1.msra.mxu0 0.0
    %125 = vmatprep.subr.mxu0 0.0
    %126 = vmatpush1.msra.mxu0 0.0
    %127 = vmatprep.subr.mxu0 0.0
    %128 = vmatpush1.msra.mxu0 0.0
    %129 = vmatprep.subr.mxu0 0.0
    %130 = vmatpush1.msra.mxu0 0.0
    %131 = vmatprep.mubr.f32.mxu0 0.0
    %132 = vmatmul.mubr.f32.gmra.mrb[0].mxu0 %v65
    %v133 = vpop.f32.mrb[0].mxu0
    %v134 = vadd.f32 0.0, %v133
    %v135 = vpop.f32.mrb[0].mxu0
    %136 = vdwg.mxu0
    %v138 = vsel %vm63, %v40, 0
    %140 = vmatprep.subr.mxu0 0.0
    %141 = vmatpush1.msra.mxu0 %v58
    %142 = vmatprep.subr.mxu0 0.0
    %143 = vmatpush1.msra.mxu0 %v62
    %144 = vmatprep.subr.mxu0 0.0
    %145 = vmatpush1.msra.mxu0 0.0
    %146 = vmatprep.subr.mxu0 0.0
    %147 = vmatpush1.msra.mxu0 0.0
    %148 = vmatprep.subr.mxu0 0.0
    %149 = vmatpush1.msra.mxu0 0.0
    %150 = vmatprep.subr.mxu0 0.0
    %151 = vmatpush1.msra.mxu0 0.0
    %152 = vmatprep.subr.mxu0 0.0
    %153 = vmatpush1.msra.mxu0 0.0
    %154 = vmatprep.subr.mxu0 0.0
    %155 = vmatpush1.msra.mxu0 0.0
    %156 = vmatprep.subr.mxu0 0.0
    %157 = vmatpush1.msra.mxu0 0.0
    %158 = vmatprep.subr.mxu0 0.0
    %159 = vmatpush1.msra.mxu0 0.0
    %160 = vmatprep.subr.mxu0 0.0
    %161 = vmatpush1.msra.mxu0 0.0
    %162 = vmatprep.subr.mxu0 0.0
    %163 = vmatpush1.msra.mxu0 0.0
    %164 = vmatprep.subr.mxu0 0.0
    %165 = vmatpush1.msra.mxu0 0.0
    %166 = vmatprep.subr.mxu0 0.0
    %167 = vmatpush1.msra.mxu0 0.0
    %168 = vmatprep.subr.mxu0 0.0
    %169 = vmatpush1.msra.mxu0 0.0
    %170 = vmatprep.subr.mxu0 0.0
    %171 = vmatpush1.msra.mxu0 0.0
    %172 = vmatprep.subr.mxu0 0.0
    %173 = vmatpush1.msra.mxu0 0.0
    %174 = vmatprep.subr.mxu0 0.0
    %175 = vmatpush1.msra.mxu0 0.0
    %176 = vmatprep.subr.mxu0 0.0
    %177 = vmatpush1.msra.mxu0 0.0
    %178 = vmatprep.subr.mxu0 0.0
    %179 = vmatpush1.msra.mxu0 0.0
    %180 = vmatprep.subr.mxu0 0.0
    %181 = vmatpush1.msra.mxu0 0.0
    %182 = vmatprep.subr.mxu0 0.0
    %183 = vmatpush1.msra.mxu0 0.0
    %184 = vmatprep.subr.mxu0 0.0
    %185 = vmatpush1.msra.mxu0 0.0
    %186 = vmatprep.subr.mxu0 0.0
    %187 = vmatpush1.msra.mxu0 0.0
    %188 = vmatprep.subr.mxu0 0.0
    %189 = vmatpush1.msra.mxu0 0.0
    %190 = vmatprep.subr.mxu0 0.0
    %191 = vmatpush1.msra.mxu0 0.0
    %192 = vmatprep.subr.mxu0 0.0
    %193 = vmatpush1.msra.mxu0 0.0
    %194 = vmatprep.subr.mxu0 0.0
    %195 = vmatpush1.msra.mxu0 0.0
    %196 = vmatprep.subr.mxu0 0.0
    %197 = vmatpush1.msra.mxu0 0.0
    %198 = vmatprep.subr.mxu0 0.0
    %199 = vmatpush1.msra.mxu0 0.0
    %200 = vmatprep.subr.mxu0 0.0
    %201 = vmatpush1.msra.mxu0 0.0
    %202 = vmatprep.subr.mxu0 0.0
    %203 = vmatpush1.msra.mxu0 0.0
    %204 = vmatprep.mubr.f32.mxu0 0.0
    %205 = vmatmul.mubr.f32.gmra.mrb[0].mxu0 %v138
    %v206 = vpop.f32.mrb[0].mxu0
    %v207 = vadd.f32 0.0, %v206
    %v208 = vpop.f32.mrb[0].mxu0
    %209 = vdwg.mxu0
    %212 = vset.pattern.permute.xlu0 0
    %213 = vperm.xlu0 %212, %v134
    %v214 = vpop.permute.xlu0 %213
    %215 = vset.pattern.permute.xlu0 0
    %216 = vperm.xlu0 %215, %v207
    %v217 = vpop.permute.xlu0 %216
    %v218 = vlaneseq
    %v219 = vand.u32 %v218, 127
    %v220 = vlaneseq
    %v221 = vshrl.u32 %v220, 7
    %v222 = vsub.s32 %v219, %v221
    %v223 = vrot.slane %v214, %v222
    %v224 = vlaneseq
    %v225 = vshrl.u32 %v224, 7
    %v226 = vsub.s32 %v219, %v225
    %v227 = vrot.slane %v217, %v226
    %vm228 = vcmask 1041409
    %v229 = vsel %vm228, %v227, %v223
    %vm231 = vcmask 25600
    %232 = vst.msk [vmem:[#allocation5] sm:$0x3] %vm231, %v229
    // Predicated region
    $region14: #{tpu_custom_call.1} parent=1 // pred_check
      _
    $region15: #{tpu_custom_call.1} parent=1 // pred_check_branch
      %234 = sbr.rel (0) target = $region17
    $region16: #{tpu_custom_call.1} parent=1 // pred_region
      %s236 = ssub.s32 32, 32
      %237 = vsyncadd [#allocation4], %s236
      %s239 = sshll.u32 [#allocation5], 4
      %s240 = int_to_ptr.vmem [resolvable:$true] %s239
      %242 = dma.vmem_to_hbm [thread:$0]  %s240, 32, %s2, [#allocation4]
    $region17: #{tpu_custom_call.1} parent=1 // pred_fallthru
      _
    // Predicated region
    $region18: #{tpu_custom_call.1} parent=1 // pred_check
      _
    $region19: #{tpu_custom_call.1} parent=1 // pred_check_branch
      %244 = sbr.rel (0) target = $region21
    $region20: #{tpu_custom_call.1} parent=1 // pred_region
      %245 = dma.done [#allocation4], 32
    $region21: #{tpu_custom_call.1} parent=1 // pred_fallthru
      _
    %246 = vsyncpa [#allocation3], 1
    %247 = vsyncpa [#allocation4], 1

</llo_original>
